<compile_context>
chip_gen: v5e
topology: v5e:2x2
jax: 0.10.0
libtpu: 0.0.40
codegen_flags: <defaults>
</compile_context>

<pallas_src>
import jax
import jax.numpy as jnp
from jax.experimental import pallas as pl
from jax.experimental.pallas import tpu as pltpu


def linear_add_relu_kernel(x_ref, w_ref, bo_ref, o_ref):
    # Single MXU push: [B, K] @ [K, N] -> [B, N] accumulated in f32.
    y = jnp.dot(x_ref[...], w_ref[...], preferred_element_type=jnp.float32)
    # Fused (bias + other) row broadcast over batch, then ReLU on the VPU.
    o_ref[...] = jnp.maximum(y + bo_ref[...], 0.0).astype(o_ref.dtype)


def linear_add_relu(x, w, b, other):
    """x: [B, K] f32, w: [K, N] f32, b: [1, N] f32, other: [1, N] f32 -> [B, N] f32"""
    B, K = x.shape
    _, N = w.shape

    # Fold the two module constants into a single row vector (one fewer
    # operand to DMA, one fewer VPU add in the kernel).
    bo = (b + other).reshape(1, N)

    return pl.pallas_call(
        linear_add_relu_kernel,
        out_shape=jax.ShapeDtypeStruct((B, N), jnp.float32),
        # No grid: single-block kernel, whole arrays resident in VMEM.
        in_specs=[
            pl.BlockSpec(memory_space=pltpu.MemorySpace.VMEM),
            pl.BlockSpec(memory_space=pltpu.MemorySpace.VMEM),
            pl.BlockSpec(memory_space=pltpu.MemorySpace.VMEM),
        ],
        out_specs=pl.BlockSpec(memory_space=pltpu.MemorySpace.VMEM),
        cost_estimate=pl.CostEstimate(
            flops=2 * B * K * N,
            bytes_accessed=4 * (B * K + K * N + N + B * N),
            transcendentals=0,
        ),
    )(x, w, bo)


# Jit the whole wrapper so the (tiny) custom call and the bo fold are compiled
# together instead of paying per-op host dispatch.
linear_add_relu_jit = jax.jit(linear_add_relu)


if __name__ == "__main__":
    key = jax.random.PRNGKey(0)
    kx, kw, kb, ko = jax.random.split(key, 4)

    B, K, N = 10, 32, 64  # matches torch.randn(10, 32) and Linear(32, 64)

    x = jax.random.normal(kx, (B, K), dtype=jnp.float32)
    # Deterministic parameter init (Linear(32, 64): weight [N, K], bias [N]).
    # Kernel consumes the weight transposed to [K, N].
    w_t = (jax.random.normal(kw, (N, K), dtype=jnp.float32) * 0.1).T
    b = jax.random.normal(kb, (1, N), dtype=jnp.float32) * 0.1
    # `other` term from the module constructor; broadcastable [1, N] row.
    other = jax.random.normal(ko, (1, N), dtype=jnp.float32)

    out = linear_add_relu_jit(x, w_t, b, other)
    out = jax.block_until_ready(out)

    # Reference check in plain JAX.
    ref = jnp.maximum(x @ w_t + b + other, 0.0)
    assert out.shape == (B, N)
    assert jnp.allclose(out, ref, atol=1e-5, rtol=1e-5)

    print("KERNEL_OK")
</pallas_src>

<mosaic_0001>
module attributes {stable_mosaic.version = 11 : i64} {
  func.func @linear_add_relu_kernel(%arg0: memref<10x32xf32, #tpu.memory_space<vmem>>, %arg1: memref<32x64xf32, #tpu.memory_space<vmem>>, %arg2: memref<1x64xf32, #tpu.memory_space<vmem>>, %arg3: memref<10x64xf32, #tpu.memory_space<vmem>>) attributes {dimension_semantics = [], scalar_prefetch = 0 : i64, scratch_operands = 0 : i64, tpu.core_type = #tpu.core_type<tc>} {
    %c0 = arith.constant 0 : index
    %c0_0 = arith.constant 0 : index
    %0 = vector.load %arg0[%c0, %c0_0] : memref<10x32xf32, #tpu.memory_space<vmem>>, vector<10x32xf32>
    %c0_1 = arith.constant 0 : index
    %c0_2 = arith.constant 0 : index
    %1 = vector.load %arg1[%c0_1, %c0_2] : memref<32x64xf32, #tpu.memory_space<vmem>>, vector<32x64xf32>
    %cst = arith.constant dense<0.000000e+00> : vector<10x64xf32>
    %2 = tpu.matmul %0, %1, %cst {dimension_numbers = #tpu.dot_dimension_numbers<[1], [0], [0], [1], [0, 0, 1, 1], [], []>} : vector<10x32xf32>, vector<32x64xf32>, vector<10x64xf32> -> vector<10x64xf32>
    %c0_3 = arith.constant 0 : index
    %c0_4 = arith.constant 0 : index
    %3 = vector.load %arg2[%c0_3, %c0_4] : memref<1x64xf32, #tpu.memory_space<vmem>>, vector<1x64xf32>
    %4 = vector.broadcast %3 : vector<1x64xf32> to vector<10x64xf32>
    %5 = arith.addf %2, %4 : vector<10x64xf32>
    %cst_5 = arith.constant 0.000000e+00 : f32
    %6 = vector.broadcast %cst_5 : f32 to vector<10x64xf32>
    %7 = arith.maximumf %5, %6 : vector<10x64xf32>
    %c0_6 = arith.constant 0 : index
    %c0_7 = arith.constant 0 : index
    %8 = vector.load %arg3[%c0_6, %c0_7] : memref<10x64xf32, #tpu.memory_space<vmem>>, vector<10x64xf32>
    tpu.vector_store %arg3[%c0_6, %c0_7], %7 {strides = array<i32>} : memref<10x64xf32, #tpu.memory_space<vmem>>, vector<10x64xf32>,
    return
  }
}

</mosaic_0001>

<llo_original>
// kernel: linear_add_relu.1
$region0: #{linear_add_relu.1}
  #allocation0 [shape = 'u32[]', space=smem, size = 0x4, offset = 0x4, fixed_abs, tag = 'smem constant byte address 0x4 - core index']
  #allocation1 [shape = 'u32[72,128]{1,0:T(1,128)}', space=vmem, size = 0x9000, scoped, tag = 'internal scratch']
  %s0 = inlined_call_operand.hbm [shape: f32[10,32], index: 0, kind: input, shape index: {}]
  %s1 = inlined_call_operand.hbm [shape: f32[32,64], index: 1, kind: input, shape index: {}]
  %s2 = inlined_call_operand.vmem [shape: f32[1,64], index: 2, kind: input, shape index: {}]
  %s3 = inlined_call_operand.hbm [shape: f32[10,64], index: 3, kind: output, shape index: {}]
  %s4 = sld [smem:[#allocation0]]
  $region30: #{linear_add_relu.1} parent=0
    _
  %s6 = ssub.s32 1, %s4
  %s7 = scalar_select 0, %s6, %s4
  $region1: #{linear_add_relu.1} parent=0
    #allocation2 [shape = 'u8[8192]{0}', space=vmem, size = 0x2000, scoped, tag = 'input window, operand 0, single buffered']
    #allocation3 [shape = 's32[1]{0}', space=sflag, size = 0x4, scoped, tag = 'scoped memory for linear_add_relu.1']
    #allocation4 [shape = 's32[1]{0}', space=sflag, size = 0x4, scoped, tag = 'scoped memory for linear_add_relu.1']
    #allocation5 [shape = 'u8[16384]{0}', space=vmem, size = 0x4000, scoped, tag = 'input window, operand 1, single buffered']
    #allocation6 [shape = 's32[1]{0}', space=sflag, size = 0x4, scoped, tag = 'scoped memory for linear_add_relu.1']
    #allocation7 [shape = 'u8[8192]{0}', space=vmem, size = 0x2000, scoped, tag = 'output window, operand 0, single buffered']
    %8 = vsyncpa [#allocation3], 0
    %9 = vsyncpa [#allocation6], 0
    %10 = vsyncpa [#allocation4], 0
    // Predicated region
    $region2: #{linear_add_relu.1} parent=1 // pred_check
      _
    $region3: #{linear_add_relu.1} parent=1 // pred_check_branch
      %12 = sbr.rel (0) target = $region5
    $region4: #{linear_add_relu.1} parent=1 // pred_region
      %14 = vsyncadd [#allocation3], 0
      %s15 = sshll.u32 %s0, 4
      %s16 = int_to_ptr.hbm [resolvable:$true] %s15
      %s17 = sshll.u32 [#allocation2], 4
      %s18 = int_to_ptr.vmem [resolvable:$true] %s17
      %23 = dma.hbm_to_vmem [thread:$0]  %s16, 256, %s18, [#allocation3], 128, 128, 8
    $region5: #{linear_add_relu.1} parent=1 // pred_fallthru
      _
    // Predicated region
    $region6: #{linear_add_relu.1} parent=1 // pred_check
      _
    $region7: #{linear_add_relu.1} parent=1 // pred_check_branch
      %25 = sbr.rel (0) target = $region9
    $region8: #{linear_add_relu.1} parent=1 // pred_region
      %27 = vsyncadd [#allocation6], 0
      %s28 = sshll.u32 %s1, 4
      %s29 = int_to_ptr.hbm [resolvable:$true] %s28
      %s30 = sshll.u32 [#allocation5], 4
      %s31 = int_to_ptr.vmem [resolvable:$true] %s30
      %36 = dma.hbm_to_vmem [thread:$0]  %s29, 512, %s31, [#allocation6], 128, 128, 8
    $region9: #{linear_add_relu.1} parent=1 // pred_fallthru
      _
    // Predicated region
    $region10: #{linear_add_relu.1} parent=1 // pred_check
      _
    $region11: #{linear_add_relu.1} parent=1 // pred_check_branch
      %38 = sbr.rel (0) target = $region13
    $region12: #{linear_add_relu.1} parent=1 // pred_region
      _
    $region13: #{linear_add_relu.1} parent=1 // pred_fallthru
      _
    // Predicated region
    $region14: #{linear_add_relu.1} parent=1 // pred_check
      _
    $region15: #{linear_add_relu.1} parent=1 // pred_check_branch
      %40 = sbr.rel (0) target = $region17
    $region16: #{linear_add_relu.1} parent=1 // pred_region
      %42 = dma.done [#allocation3], 256
    $region17: #{linear_add_relu.1} parent=1 // pred_fallthru
      _
    // Predicated region
    $region18: #{linear_add_relu.1} parent=1 // pred_check
      _
    $region19: #{linear_add_relu.1} parent=1 // pred_check_branch
      %44 = sbr.rel (0) target = $region21
    $region20: #{linear_add_relu.1} parent=1 // pred_region
      %46 = dma.done [#allocation6], 512
    $region21: #{linear_add_relu.1} parent=1 // pred_fallthru
      _
    %v47 = vld [vmem:[#allocation2] sm:$0xff]
    %v48 = vld [vmem:[#allocation2 + $0x8] sm:$0x3]
    %v49 = vld [vmem:[#allocation5] sm:$0xff]
    %v50 = vld [vmem:[#allocation5 + $0x8] sm:$0xff]
    %v51 = vld [vmem:[#allocation5 + $0x10] sm:$0xff]
    %v52 = vld [vmem:[#allocation5 + $0x18] sm:$0xff]
    %v53 = vld [vmem:[%s2] sm:$0x1]
    %v55 = vperm.slane %v53, 0
    %vm57 = vcmask 261120
    %v59 = vsel %vm57, %v47, 0
    %v62 = vsel %vm57, %v48, 0
    %64 = vmatpush.msra.mxu0 0.0
    %65 = vmatpush.msra.mxu0 0.0
    %66 = vmatpush.msra.mxu0 0.0
    %67 = vmatpush.msra.mxu0 0.0
    %68 = vmatpush.msra.mxu0 0.0
    %69 = vmatpush.msra.mxu0 0.0
    %70 = vmatpush.msra.mxu0 0.0
    %71 = vmatpush.msra.mxu0 0.0
    %72 = vmatpush.msra.mxu0 0.0
    %73 = vmatpush.msra.mxu0 0.0
    %74 = vmatpush.msra.mxu0 0.0
    %75 = vmatpush.msra.mxu0 0.0
    %76 = vmatpush.msra.mxu0 %v52
    %77 = vmatpush.msra.mxu0 %v51
    %78 = vmatpush.msra.mxu0 %v50
    %79 = vmatpush.msra.mxu0 %v49
    %80 = vmatmul.f32.gmra.mxu0 %v59
    %v81 = vpop.f32.mrf.mxu0
    %v82 = vadd.f32 %v55, %v81
    %83 = vmatmul.f32.gmra.mxu0 %v62
    %v84 = vpop.f32.mrf.mxu0
    %v85 = vadd.f32 %v55, %v84
    %86 = vdwg.mxu0
    %v87 = vmax.f32 %v82, 0.0
    %v88 = vmax.f32 %v85, 0.0
    %vm89 = vcmask 523264
    %90 = vst.msk [vmem:[#allocation7] sm:$0xff] %vm89, %v87
    %vm91 = vcmask 517120
    %92 = vst.msk [vmem:[#allocation7 + $0x8] sm:$0x3] %vm91, %v88
    // Predicated region
    $region22: #{linear_add_relu.1} parent=1 // pred_check
      _
    $region23: #{linear_add_relu.1} parent=1 // pred_check_branch
      %94 = sbr.rel (0) target = $region25
    $region24: #{linear_add_relu.1} parent=1 // pred_region
      %96 = vsyncadd [#allocation4], 0
      %s97 = sshll.u32 [#allocation7], 4
      %s98 = int_to_ptr.vmem [resolvable:$true] %s97
      %s99 = sshll.u32 %s3, 4
      %s100 = int_to_ptr.hbm [resolvable:$true] %s99
      %105 = dma.vmem_to_hbm [thread:$0]  %s98, 256, %s100, [#allocation4], 128, 128, 8
    $region25: #{linear_add_relu.1} parent=1 // pred_fallthru
      _
    // Predicated region
    $region26: #{linear_add_relu.1} parent=1 // pred_check
      _
    $region27: #{linear_add_relu.1} parent=1 // pred_check_branch
      %107 = sbr.rel (0) target = $region29
    $region28: #{linear_add_relu.1} parent=1 // pred_region
      %109 = dma.done [#allocation4], 256
    $region29: #{linear_add_relu.1} parent=1 // pred_fallthru
      _
    %110 = vsyncpa [#allocation3], 1
    %111 = vsyncpa [#allocation6], 1
    %112 = vsyncpa [#allocation4], 1

</llo_original>
